<compile_context>
chip_gen: v5e
topology: v5e:2x2
jax: 0.10.0
libtpu: 0.0.40
codegen_flags: <defaults>
</compile_context>

<pallas_src>
import functools

import jax
import jax.numpy as jnp
from jax.experimental import pallas as pl
from jax.experimental.pallas import tpu as pltpu


def _silu(x):
    # Exact SiLU.  An EUP-friendly approximation
    # (x * pl.reciprocal(1 + jnp.exp(-x), approx=True)) would move the divide
    # off the VPU, but introduces ~1e-3 relative error vs the 1e-4 tolerance,
    # so the exact form is kept.
    return x * jax.nn.sigmoid(x)


def _tree_sum(terms):
    """Balanced pairwise sum (breaks serial FMA dependency chains)."""
    terms = list(terms)
    while len(terms) > 1:
        nxt = [terms[i] + terms[i + 1] for i in range(0, len(terms) - 1, 2)]
        if len(terms) % 2:
            nxt.append(terms[-1])
        terms = nxt
    return terms[0]


def _bottleneck_kernel(x_ref, w1_ref, w2_ref, o_ref, *, C1, CH, C2, B, W, add):
    # x_ref:  (1, C1*B, HW)        channel-major batch stacking: row = c1*B + b
    # w1_ref: (CH, C1, B, HW)      cv1 weight, replicated across lanes/batch
    # w2_ref: (CH, 9, C2*B, HW)    cv2 weight, replicated across lanes/batch and
    #                              pre-multiplied by the zero-padding border mask
    # o_ref:  (1, C2*B, HW)        row = c2*B + b
    HW = x_ref.shape[-1]
    x = x_ref[0].astype(jnp.float32)                       # (C1*B, HW)

    # ---- cv1: 1x1 conv -> SiLU.  Each term is a full-tile VMEM load * VPU mul
    # (no in-kernel lane or sublane broadcasts).
    h_exp = []
    for ch in range(CH):
        terms = [w1_ref[ch, c1] * x[c1 * B:(c1 + 1) * B, :]
                 for c1 in range(C1)]
        h_ch = _silu(_tree_sum(terms))                     # (B, HW)
        # Expand ONCE per hidden channel to the output row layout
        # (row c2*B + b == h_ch[b]); reused across all 9 taps below.
        h_exp.append(jnp.tile(h_ch, (C2, 1)))              # (C2*B, HW)

    # ---- cv2: 3x3 conv (pad=1) -> SiLU.  Taps are lane rolls; border masks are
    # baked into w2_ref by the wrapper, so the inner loop is roll + mul + add.
    parts = [None, None, None]                             # 3 accumulators break
    slot = 0                                               # the 18-term chain
    for ch in range(CH):
        hc = h_exp[ch]
        for t in range(9):
            ky, kx = divmod(t, 3)
            d = (ky - 1) * W + (kx - 1)                    # flattened src offset
            rolled = hc if d == 0 else pltpu.roll(hc, shift=(-d) % HW, axis=1)
            term = w2_ref[ch, t] * rolled                  # (C2*B, HW)
            parts[slot] = term if parts[slot] is None else parts[slot] + term
            slot = (slot + 1) % len(parts)
    acc = _tree_sum([p for p in parts if p is not None])

    out = _silu(acc)                                       # (C2*B, HW)
    if add:
        out = out + x                                      # C1 == C2, same layout
    o_ref[0] = out.astype(o_ref.dtype)


def bottleneck_forward(x_nchw, w1_torch, w2_torch, *, shortcut=True, gn=True):
    """x_nchw: (N, C1, H, W); w1_torch: (CH, C1, 1, 1); w2_torch: (C2, CH, 3, 3)."""
    N, C1, H, W = x_nchw.shape
    CH = w1_torch.shape[0]
    C2 = w2_torch.shape[0]
    HW = H * W

    # ConvBlock only uses real GroupNorm when gn and out_channels // 8 >= 16;
    # otherwise it is nn.Identity.  Refuse shapes where the norm would be real.
    # TODO(synk): implement the GroupNorm branch for out_channels >= 128.
    for oc in (CH, C2):
        if gn and oc // 8 >= 16:
            raise NotImplementedError(
                "GroupNorm branch (out_channels >= 128) not implemented")
    assert HW % 128 == 0, "H*W must be a multiple of 128 for lane-dense stores"
    # TODO(synk): pad HW to a multiple of 128 (and rework border masks / add an
    #             HW grid axis) before scaling spatial dims on v7x's 64MiB VMEM.

    add = bool(shortcut and C1 == C2)

    # Batch tile: stack B batch elements onto sublanes so 8-sublane vregs are
    # full.  Largest divisor of N with B*max(C1,C2) <= 8; for N >= 2*B this also
    # keeps a >= 2-step parallel grid for v7x's two TensorCores.
    cmax = max(C1, C2)
    B = 1
    for cand in range(min(N, max(1, 8 // cmax)), 0, -1):
        if N % cand == 0:
            B = cand
            break
    NB = N // B

    f32 = jnp.float32

    # Channel-major sublane stacking: kernel row index = channel*B + batch.
    # (Tiny wrapper-side transpose = layout plumbing, stays out of the kernel.)
    x = x_nchw.reshape(NB, B, C1, HW).transpose(0, 2, 1, 3).reshape(
        NB, C1 * B, HW)

    # cv1 weights replicated to full (B, HW) tiles per (ch, c1): the kernel
    # multiplies lane-dense vregs with zero broadcast ops.  (~tens of KiB)
    w1_2d = w1_torch[:, :, 0, 0].astype(f32)                         # (CH, C1)
    w1_rep = jnp.broadcast_to(w1_2d[:, :, None, None], (CH, C1, B, HW))

    # cv2 weights: per (ch, tap) a full (C2*B, HW) tile, lane-replicated and
    # pre-multiplied by that tap's zero-padding border mask.
    w2_flat = w2_torch.reshape(C2, CH, 9).astype(f32)
    cols = jnp.arange(HW, dtype=jnp.int32) % W
    rows = jnp.arange(HW, dtype=jnp.int32) // W
    valid = []
    for ky in range(3):
        for kx in range(3):
            dy, dx = ky - 1, kx - 1
            v = jnp.ones((HW,), dtype=bool)
            if dx == -1:
                v = v & (cols >= 1)
            elif dx == 1:
                v = v & (cols <= W - 2)
            if dy == -1:
                v = v & (rows >= 1)
            elif dy == 1:
                v = v & (rows <= H - 2)
            valid.append(v)
    valid = jnp.stack(valid).astype(f32)                             # (9, HW)
    w2_cht = jnp.transpose(w2_flat, (1, 2, 0))                       # (CH, 9, C2)
    w2_rep = w2_cht[:, :, :, None, None] * valid[None, :, None, None, :]
    w2_rep = jnp.broadcast_to(w2_rep, (CH, 9, C2, B, HW)).reshape(
        CH, 9, C2 * B, HW)

    kernel = functools.partial(_bottleneck_kernel, C1=C1, CH=CH, C2=C2, B=B,
                               W=W, add=add)

    out = pl.pallas_call(
        kernel,
        out_shape=jax.ShapeDtypeStruct((NB, C2 * B, HW), x_nchw.dtype),
        grid_spec=pltpu.PrefetchScalarGridSpec(
            num_scalar_prefetch=0,
            grid=(NB,),
            in_specs=[
                pl.BlockSpec((1, C1 * B, HW), lambda n: (n, 0, 0)),
                pl.BlockSpec((CH, C1, B, HW), lambda n: (0, 0, 0, 0)),
                pl.BlockSpec((CH, 9, C2 * B, HW), lambda n: (0, 0, 0, 0)),
            ],
            out_specs=pl.BlockSpec((1, C2 * B, HW), lambda n: (n, 0, 0)),
        ),
        compiler_params=pltpu.CompilerParams(
            dimension_semantics=("parallel",)),
    )(x, w1_rep, w2_rep)

    # Undo the channel-major batch stacking.
    out = out.reshape(NB, C2, B, H, W).transpose(0, 2, 1, 3, 4).reshape(
        N, C2, H, W)
    return out


def _reference(x_nchw, w1_torch, w2_torch, *, shortcut=True):
    """Pure-JAX reference (lax.conv) for a sanity check."""
    h = jax.lax.conv_general_dilated(
        x_nchw, w1_torch, window_strides=(1, 1), padding="SAME",
        dimension_numbers=("NCHW", "OIHW", "NCHW"))
    h = _silu(h)
    o = jax.lax.conv_general_dilated(
        h, w2_torch, window_strides=(1, 1), padding="SAME",
        dimension_numbers=("NCHW", "OIHW", "NCHW"))
    o = _silu(o)
    if shortcut and x_nchw.shape[1] == o.shape[1]:
        o = o + x_nchw
    return o


if __name__ == "__main__":
    # Bottleneck(c1=4, c2=4, shortcut=True, e=0.5, gn=True, spatial=True)
    N, C1, C2, H, W = 2, 4, 4, 16, 16
    E = 0.5
    CH = int(C2 * E)

    key = jax.random.PRNGKey(0)
    k_x, k_1, k_2 = jax.random.split(key, 3)
    x = jax.random.normal(k_x, (N, C1, H, W), dtype=jnp.float32)
    w1 = jax.random.normal(k_1, (CH, C1, 1, 1), dtype=jnp.float32) * 0.1
    w2 = jax.random.normal(k_2, (C2, CH, 3, 3), dtype=jnp.float32) * 0.1

    out = bottleneck_forward(x, w1, w2, shortcut=True)
    out = jax.block_until_ready(out)

    ref = _reference(x, w1, w2, shortcut=True)
    assert out.shape == (N, C2, H, W), out.shape
    assert jnp.allclose(out, ref, atol=1e-4, rtol=1e-4), float(
        jnp.max(jnp.abs(out - ref)))

    print("KERNEL_OK")
</pallas_src>

<mosaic_0001>
module attributes {stable_mosaic.version = 11 : i64} {
  func.func @_bottleneck_kernel(%arg0: i32, %arg1: memref<1x8x256xf32, #tpu.memory_space<vmem>>, %arg2: memref<2x4x2x256xf32, #tpu.memory_space<vmem>>, %arg3: memref<2x9x8x256xf32, #tpu.memory_space<vmem>>, %arg4: memref<1x8x256xf32, #tpu.memory_space<vmem>>) attributes {dimension_semantics = [#tpu.dimension_semantics<parallel>], iteration_bounds = array<i64: 1>, scalar_prefetch = 0 : i64, scratch_operands = 0 : i64, tpu.core_type = #tpu.core_type<tc>, window_params = [{transform_indices = @transform_0, window_bounds = array<i64: 1, 8, 256>}, {pipeline_mode = #tpu.pipeline_mode<synchronous>, transform_indices = @transform_1, window_bounds = array<i64: 2, 4, 2, 256>}, {pipeline_mode = #tpu.pipeline_mode<synchronous>, transform_indices = @transform_2, window_bounds = array<i64: 2, 9, 8, 256>}, {transform_indices = @transform_3, window_bounds = array<i64: 1, 8, 256>}]} {
    %c0 = arith.constant 0 : index
    %c0_0 = arith.constant 0 : index
    %c0_1 = arith.constant 0 : index
    %0 = vector.load %arg1[%c0, %c0_0, %c0_1] : memref<1x8x256xf32, #tpu.memory_space<vmem>>, vector<1x8x256xf32>
    %1 = vector.shape_cast %0 : vector<1x8x256xf32> to vector<8x256xf32>
    %c0_2 = arith.constant 0 : index
    %c0_3 = arith.constant 0 : index
    %c0_4 = arith.constant 0 : index
    %c0_5 = arith.constant 0 : index
    %2 = vector.load %arg2[%c0_2, %c0_3, %c0_4, %c0_5] : memref<2x4x2x256xf32, #tpu.memory_space<vmem>>, vector<1x1x2x256xf32>
    %3 = vector.shape_cast %2 : vector<1x1x2x256xf32> to vector<2x256xf32>
    %4 = vector.extract_strided_slice %1 {offsets = [0, 0], sizes = [2, 256], strides = [1, 1]} : vector<8x256xf32> to vector<2x256xf32>
    %5 = arith.mulf %3, %4 : vector<2x256xf32>
    %c0_6 = arith.constant 0 : index
    %c1 = arith.constant 1 : index
    %c0_7 = arith.constant 0 : index
    %c0_8 = arith.constant 0 : index
    %6 = vector.load %arg2[%c0_6, %c1, %c0_7, %c0_8] : memref<2x4x2x256xf32, #tpu.memory_space<vmem>>, vector<1x1x2x256xf32>
    %7 = vector.shape_cast %6 : vector<1x1x2x256xf32> to vector<2x256xf32>
    %8 = vector.extract_strided_slice %1 {offsets = [2, 0], sizes = [2, 256], strides = [1, 1]} : vector<8x256xf32> to vector<2x256xf32>
    %9 = arith.mulf %7, %8 : vector<2x256xf32>
    %c0_9 = arith.constant 0 : index
    %c2 = arith.constant 2 : index
    %c0_10 = arith.constant 0 : index
    %c0_11 = arith.constant 0 : index
    %10 = vector.load %arg2[%c0_9, %c2, %c0_10, %c0_11] : memref<2x4x2x256xf32, #tpu.memory_space<vmem>>, vector<1x1x2x256xf32>
    %11 = vector.shape_cast %10 : vector<1x1x2x256xf32> to vector<2x256xf32>
    %12 = vector.extract_strided_slice %1 {offsets = [4, 0], sizes = [2, 256], strides = [1, 1]} : vector<8x256xf32> to vector<2x256xf32>
    %13 = arith.mulf %11, %12 : vector<2x256xf32>
    %c0_12 = arith.constant 0 : index
    %c3 = arith.constant 3 : index
    %c0_13 = arith.constant 0 : index
    %c0_14 = arith.constant 0 : index
    %14 = vector.load %arg2[%c0_12, %c3, %c0_13, %c0_14] : memref<2x4x2x256xf32, #tpu.memory_space<vmem>>, vector<1x1x2x256xf32>
    %15 = vector.shape_cast %14 : vector<1x1x2x256xf32> to vector<2x256xf32>
    %16 = vector.extract_strided_slice %1 {offsets = [6, 0], sizes = [2, 256], strides = [1, 1]} : vector<8x256xf32> to vector<2x256xf32>
    %17 = arith.mulf %15, %16 : vector<2x256xf32>
    %18 = arith.addf %5, %9 : vector<2x256xf32>
    %19 = arith.addf %13, %17 : vector<2x256xf32>
    %20 = arith.addf %18, %19 : vector<2x256xf32>
    %21 = arith.negf %20 : vector<2x256xf32>
    %22 = math.exp %21 : vector<2x256xf32>
    %cst = arith.constant 1.000000e+00 : f32
    %23 = vector.broadcast %cst : f32 to vector<2x256xf32>
    %24 = arith.addf %23, %22 : vector<2x256xf32>
    %25 = arith.divf %23, %24 : vector<2x256xf32>
    %26 = arith.mulf %20, %25 : vector<2x256xf32>
    %27 = tpu.concatenate %26, %26, %26, %26 in 0 : vector<2x256xf32>, vector<2x256xf32>, vector<2x256xf32>, vector<2x256xf32> -> vector<8x256xf32>
    %c1_15 = arith.constant 1 : index
    %c0_16 = arith.constant 0 : index
    %c0_17 = arith.constant 0 : index
    %c0_18 = arith.constant 0 : index
    %28 = vector.load %arg2[%c1_15, %c0_16, %c0_17, %c0_18] : memref<2x4x2x256xf32, #tpu.memory_space<vmem>>, vector<1x1x2x256xf32>
    %29 = vector.shape_cast %28 : vector<1x1x2x256xf32> to vector<2x256xf32>
    %30 = vector.extract_strided_slice %1 {offsets = [0, 0], sizes = [2, 256], strides = [1, 1]} : vector<8x256xf32> to vector<2x256xf32>
    %31 = arith.mulf %29, %30 : vector<2x256xf32>
    %c1_19 = arith.constant 1 : index
    %c1_20 = arith.constant 1 : index
    %c0_21 = arith.constant 0 : index
    %c0_22 = arith.constant 0 : index
    %32 = vector.load %arg2[%c1_19, %c1_20, %c0_21, %c0_22] : memref<2x4x2x256xf32, #tpu.memory_space<vmem>>, vector<1x1x2x256xf32>
    %33 = vector.shape_cast %32 : vector<1x1x2x256xf32> to vector<2x256xf32>
    %34 = vector.extract_strided_slice %1 {offsets = [2, 0], sizes = [2, 256], strides = [1, 1]} : vector<8x256xf32> to vector<2x256xf32>
    %35 = arith.mulf %33, %34 : vector<2x256xf32>
    %c1_23 = arith.constant 1 : index
    %c2_24 = arith.constant 2 : index
    %c0_25 = arith.constant 0 : index
    %c0_26 = arith.constant 0 : index
    %36 = vector.load %arg2[%c1_23, %c2_24, %c0_25, %c0_26] : memref<2x4x2x256xf32, #tpu.memory_space<vmem>>, vector<1x1x2x256xf32>
    %37 = vector.shape_cast %36 : vector<1x1x2x256xf32> to vector<2x256xf32>
    %38 = vector.extract_strided_slice %1 {offsets = [4, 0], sizes = [2, 256], strides = [1, 1]} : vector<8x256xf32> to vector<2x256xf32>
    %39 = arith.mulf %37, %38 : vector<2x256xf32>
    %c1_27 = arith.constant 1 : index
    %c3_28 = arith.constant 3 : index
    %c0_29 = arith.constant 0 : index
    %c0_30 = arith.constant 0 : index
    %40 = vector.load %arg2[%c1_27, %c3_28, %c0_29, %c0_30] : memref<2x4x2x256xf32, #tpu.memory_space<vmem>>, vector<1x1x2x256xf32>
    %41 = vector.shape_cast %40 : vector<1x1x2x256xf32> to vector<2x256xf32>
    %42 = vector.extract_strided_slice %1 {offsets = [6, 0], sizes = [2, 256], strides = [1, 1]} : vector<8x256xf32> to vector<2x256xf32>
    %43 = arith.mulf %41, %42 : vector<2x256xf32>
    %44 = arith.addf %31, %35 : vector<2x256xf32>
    %45 = arith.addf %39, %43 : vector<2x256xf32>
    %46 = arith.addf %44, %45 : vector<2x256xf32>
    %47 = arith.negf %46 : vector<2x256xf32>
    %48 = math.exp %47 : vector<2x256xf32>
    %cst_31 = arith.constant 1.000000e+00 : f32
    %49 = vector.broadcast %cst_31 : f32 to vector<2x256xf32>
    %50 = arith.addf %49, %48 : vector<2x256xf32>
    %51 = arith.divf %49, %50 : vector<2x256xf32>
    %52 = arith.mulf %46, %51 : vector<2x256xf32>
    %53 = tpu.concatenate %52, %52, %52, %52 in 0 : vector<2x256xf32>, vector<2x256xf32>, vector<2x256xf32>, vector<2x256xf32> -> vector<8x256xf32>
    %c17_i32 = arith.constant 17 : i32
    %54 = tpu.dynamic_rotate %27 by %c17_i32 dim 1 : vector<8x256xf32>, i32 -> vector<8x256xf32>
    %c0_32 = arith.constant 0 : index
    %c0_33 = arith.constant 0 : index
    %c0_34 = arith.constant 0 : index
    %c0_35 = arith.constant 0 : index
    %55 = vector.load %arg3[%c0_32, %c0_33, %c0_34, %c0_35] : memref<2x9x8x256xf32, #tpu.memory_space<vmem>>, vector<1x1x8x256xf32>
    %56 = vector.shape_cast %55 : vector<1x1x8x256xf32> to vector<8x256xf32>
    %57 = arith.mulf %56, %54 : vector<8x256xf32>
    %c16_i32 = arith.constant 16 : i32
    %58 = tpu.dynamic_rotate %27 by %c16_i32 dim 1 : vector<8x256xf32>, i32 -> vector<8x256xf32>
    %c0_36 = arith.constant 0 : index
    %c1_37 = arith.constant 1 : index
    %c0_38 = arith.constant 0 : index
    %c0_39 = arith.constant 0 : index
    %59 = vector.load %arg3[%c0_36, %c1_37, %c0_38, %c0_39] : memref<2x9x8x256xf32, #tpu.memory_space<vmem>>, vector<1x1x8x256xf32>
    %60 = vector.shape_cast %59 : vector<1x1x8x256xf32> to vector<8x256xf32>
    %61 = arith.mulf %60, %58 : vector<8x256xf32>
    %c15_i32 = arith.constant 15 : i32
    %62 = tpu.dynamic_rotate %27 by %c15_i32 dim 1 : vector<8x256xf32>, i32 -> vector<8x256xf32>
    %c0_40 = arith.constant 0 : index
    %c2_41 = arith.constant 2 : index
    %c0_42 = arith.constant 0 : index
    %c0_43 = arith.constant 0 : index
    %63 = vector.load %arg3[%c0_40, %c2_41, %c0_42, %c0_43] : memref<2x9x8x256xf32, #tpu.memory_space<vmem>>, vector<1x1x8x256xf32>
    %64 = vector.shape_cast %63 : vector<1x1x8x256xf32> to vector<8x256xf32>
    %65 = arith.mulf %64, %62 : vector<8x256xf32>
    %c1_i32 = arith.constant 1 : i32
    %66 = tpu.dynamic_rotate %27 by %c1_i32 dim 1 : vector<8x256xf32>, i32 -> vector<8x256xf32>
    %c0_44 = arith.constant 0 : index
    %c3_45 = arith.constant 3 : index
    %c0_46 = arith.constant 0 : index
    %c0_47 = arith.constant 0 : index
    %67 = vector.load %arg3[%c0_44, %c3_45, %c0_46, %c0_47] : memref<2x9x8x256xf32, #tpu.memory_space<vmem>>, vector<1x1x8x256xf32>
    %68 = vector.shape_cast %67 : vector<1x1x8x256xf32> to vector<8x256xf32>
    %69 = arith.mulf %68, %66 : vector<8x256xf32>
    %70 = arith.addf %57, %69 : vector<8x256xf32>
    %c0_48 = arith.constant 0 : index
    %c4 = arith.constant 4 : index
    %c0_49 = arith.constant 0 : index
    %c0_50 = arith.constant 0 : index
    %71 = vector.load %arg3[%c0_48, %c4, %c0_49, %c0_50] : memref<2x9x8x256xf32, #tpu.memory_space<vmem>>, vector<1x1x8x256xf32>
    %72 = vector.shape_cast %71 : vector<1x1x8x256xf32> to vector<8x256xf32>
    %73 = arith.mulf %72, %27 : vector<8x256xf32>
    %74 = arith.addf %61, %73 : vector<8x256xf32>
    %c255_i32 = arith.constant 255 : i32
    %75 = tpu.dynamic_rotate %27 by %c255_i32 dim 1 : vector<8x256xf32>, i32 -> vector<8x256xf32>
    %c0_51 = arith.constant 0 : index
    %c5 = arith.constant 5 : index
    %c0_52 = arith.constant 0 : index
    %c0_53 = arith.constant 0 : index
    %76 = vector.load %arg3[%c0_51, %c5, %c0_52, %c0_53] : memref<2x9x8x256xf32, #tpu.memory_space<vmem>>, vector<1x1x8x256xf32>
    %77 = vector.shape_cast %76 : vector<1x1x8x256xf32> to vector<8x256xf32>
    %78 = arith.mulf %77, %75 : vector<8x256xf32>
    %79 = arith.addf %65, %78 : vector<8x256xf32>
    %c241_i32 = arith.constant 241 : i32
    %80 = tpu.dynamic_rotate %27 by %c241_i32 dim 1 : vector<8x256xf32>, i32 -> vector<8x256xf32>
    %c0_54 = arith.constant 0 : index
    %c6 = arith.constant 6 : index
    %c0_55 = arith.constant 0 : index
    %c0_56 = arith.constant 0 : index
    %81 = vector.load %arg3[%c0_54, %c6, %c0_55, %c0_56] : memref<2x9x8x256xf32, #tpu.memory_space<vmem>>, vector<1x1x8x256xf32>
    %82 = vector.shape_cast %81 : vector<1x1x8x256xf32> to vector<8x256xf32>
    %83 = arith.mulf %82, %80 : vector<8x256xf32>
    %84 = arith.addf %70, %83 : vector<8x256xf32>
    %c240_i32 = arith.constant 240 : i32
    %85 = tpu.dynamic_rotate %27 by %c240_i32 dim 1 : vector<8x256xf32>, i32 -> vector<8x256xf32>
    %c0_57 = arith.constant 0 : index
    %c7 = arith.constant 7 : index
    %c0_58 = arith.constant 0 : index
    %c0_59 = arith.constant 0 : index
    %86 = vector.load %arg3[%c0_57, %c7, %c0_58, %c0_59] : memref<2x9x8x256xf32, #tpu.memory_space<vmem>>, vector<1x1x8x256xf32>
    %87 = vector.shape_cast %86 : vector<1x1x8x256xf32> to vector<8x256xf32>
    %88 = arith.mulf %87, %85 : vector<8x256xf32>
    %89 = arith.addf %74, %88 : vector<8x256xf32>
    %c239_i32 = arith.constant 239 : i32
    %90 = tpu.dynamic_rotate %27 by %c239_i32 dim 1 : vector<8x256xf32>, i32 -> vector<8x256xf32>
    %c0_60 = arith.constant 0 : index
    %c8 = arith.constant 8 : index
    %c0_61 = arith.constant 0 : index
    %c0_62 = arith.constant 0 : index
    %91 = vector.load %arg3[%c0_60, %c8, %c0_61, %c0_62] : memref<2x9x8x256xf32, #tpu.memory_space<vmem>>, vector<1x1x8x256xf32>
    %92 = vector.shape_cast %91 : vector<1x1x8x256xf32> to vector<8x256xf32>
    %93 = arith.mulf %92, %90 : vector<8x256xf32>
    %94 = arith.addf %79, %93 : vector<8x256xf32>
    %c17_i32_63 = arith.constant 17 : i32
    %95 = tpu.dynamic_rotate %53 by %c17_i32_63 dim 1 : vector<8x256xf32>, i32 -> vector<8x256xf32>
    %c1_64 = arith.constant 1 : index
    %c0_65 = arith.constant 0 : index
    %c0_66 = arith.constant 0 : index
    %c0_67 = arith.constant 0 : index
    %96 = vector.load %arg3[%c1_64, %c0_65, %c0_66, %c0_67] : memref<2x9x8x256xf32, #tpu.memory_space<vmem>>, vector<1x1x8x256xf32>
    %97 = vector.shape_cast %96 : vector<1x1x8x256xf32> to vector<8x256xf32>
    %98 = arith.mulf %97, %95 : vector<8x256xf32>
    %99 = arith.addf %84, %98 : vector<8x256xf32>
    %c16_i32_68 = arith.constant 16 : i32
    %100 = tpu.dynamic_rotate %53 by %c16_i32_68 dim 1 : vector<8x256xf32>, i32 -> vector<8x256xf32>
    %c1_69 = arith.constant 1 : index
    %c1_70 = arith.constant 1 : index
    %c0_71 = arith.constant 0 : index
    %c0_72 = arith.constant 0 : index
    %101 = vector.load %arg3[%c1_69, %c1_70, %c0_71, %c0_72] : memref<2x9x8x256xf32, #tpu.memory_space<vmem>>, vector<1x1x8x256xf32>
    %102 = vector.shape_cast %101 : vector<1x1x8x256xf32> to vector<8x256xf32>
    %103 = arith.mulf %102, %100 : vector<8x256xf32>
    %104 = arith.addf %89, %103 : vector<8x256xf32>
    %c15_i32_73 = arith.constant 15 : i32
    %105 = tpu.dynamic_rotate %53 by %c15_i32_73 dim 1 : vector<8x256xf32>, i32 -> vector<8x256xf32>
    %c1_74 = arith.constant 1 : index
    %c2_75 = arith.constant 2 : index
    %c0_76 = arith.constant 0 : index
    %c0_77 = arith.constant 0 : index
    %106 = vector.load %arg3[%c1_74, %c2_75, %c0_76, %c0_77] : memref<2x9x8x256xf32, #tpu.memory_space<vmem>>, vector<1x1x8x256xf32>
    %107 = vector.shape_cast %106 : vector<1x1x8x256xf32> to vector<8x256xf32>
    %108 = arith.mulf %107, %105 : vector<8x256xf32>
    %109 = arith.addf %94, %108 : vector<8x256xf32>
    %c1_i32_78 = arith.constant 1 : i32
    %110 = tpu.dynamic_rotate %53 by %c1_i32_78 dim 1 : vector<8x256xf32>, i32 -> vector<8x256xf32>
    %c1_79 = arith.constant 1 : index
    %c3_80 = arith.constant 3 : index
    %c0_81 = arith.constant 0 : index
    %c0_82 = arith.constant 0 : index
    %111 = vector.load %arg3[%c1_79, %c3_80, %c0_81, %c0_82] : memref<2x9x8x256xf32, #tpu.memory_space<vmem>>, vector<1x1x8x256xf32>
    %112 = vector.shape_cast %111 : vector<1x1x8x256xf32> to vector<8x256xf32>
    %113 = arith.mulf %112, %110 : vector<8x256xf32>
    %114 = arith.addf %99, %113 : vector<8x256xf32>
    %c1_83 = arith.constant 1 : index
    %c4_84 = arith.constant 4 : index
    %c0_85 = arith.constant 0 : index
    %c0_86 = arith.constant 0 : index
    %115 = vector.load %arg3[%c1_83, %c4_84, %c0_85, %c0_86] : memref<2x9x8x256xf32, #tpu.memory_space<vmem>>, vector<1x1x8x256xf32>
    %116 = vector.shape_cast %115 : vector<1x1x8x256xf32> to vector<8x256xf32>
    %117 = arith.mulf %116, %53 : vector<8x256xf32>
    %118 = arith.addf %104, %117 : vector<8x256xf32>
    %c255_i32_87 = arith.constant 255 : i32
    %119 = tpu.dynamic_rotate %53 by %c255_i32_87 dim 1 : vector<8x256xf32>, i32 -> vector<8x256xf32>
    %c1_88 = arith.constant 1 : index
    %c5_89 = arith.constant 5 : index
    %c0_90 = arith.constant 0 : index
    %c0_91 = arith.constant 0 : index
    %120 = vector.load %arg3[%c1_88, %c5_89, %c0_90, %c0_91] : memref<2x9x8x256xf32, #tpu.memory_space<vmem>>, vector<1x1x8x256xf32>
    %121 = vector.shape_cast %120 : vector<1x1x8x256xf32> to vector<8x256xf32>
    %122 = arith.mulf %121, %119 : vector<8x256xf32>
    %123 = arith.addf %109, %122 : vector<8x256xf32>
    %c241_i32_92 = arith.constant 241 : i32
    %124 = tpu.dynamic_rotate %53 by %c241_i32_92 dim 1 : vector<8x256xf32>, i32 -> vector<8x256xf32>
    %c1_93 = arith.constant 1 : index
    %c6_94 = arith.constant 6 : index
    %c0_95 = arith.constant 0 : index
    %c0_96 = arith.constant 0 : index
    %125 = vector.load %arg3[%c1_93, %c6_94, %c0_95, %c0_96] : memref<2x9x8x256xf32, #tpu.memory_space<vmem>>, vector<1x1x8x256xf32>
    %126 = vector.shape_cast %125 : vector<1x1x8x256xf32> to vector<8x256xf32>
    %127 = arith.mulf %126, %124 : vector<8x256xf32>
    %128 = arith.addf %114, %127 : vector<8x256xf32>
    %c240_i32_97 = arith.constant 240 : i32
    %129 = tpu.dynamic_rotate %53 by %c240_i32_97 dim 1 : vector<8x256xf32>, i32 -> vector<8x256xf32>
    %c1_98 = arith.constant 1 : index
    %c7_99 = arith.constant 7 : index
    %c0_100 = arith.constant 0 : index
    %c0_101 = arith.constant 0 : index
    %130 = vector.load %arg3[%c1_98, %c7_99, %c0_100, %c0_101] : memref<2x9x8x256xf32, #tpu.memory_space<vmem>>, vector<1x1x8x256xf32>
    %131 = vector.shape_cast %130 : vector<1x1x8x256xf32> to vector<8x256xf32>
    %132 = arith.mulf %131, %129 : vector<8x256xf32>
    %133 = arith.addf %118, %132 : vector<8x256xf32>
    %c239_i32_102 = arith.constant 239 : i32
    %134 = tpu.dynamic_rotate %53 by %c239_i32_102 dim 1 : vector<8x256xf32>, i32 -> vector<8x256xf32>
    %c1_103 = arith.constant 1 : index
    %c8_104 = arith.constant 8 : index
    %c0_105 = arith.constant 0 : index
    %c0_106 = arith.constant 0 : index
    %135 = vector.load %arg3[%c1_103, %c8_104, %c0_105, %c0_106] : memref<2x9x8x256xf32, #tpu.memory_space<vmem>>, vector<1x1x8x256xf32>
    %136 = vector.shape_cast %135 : vector<1x1x8x256xf32> to vector<8x256xf32>
    %137 = arith.mulf %136, %134 : vector<8x256xf32>
    %138 = arith.addf %123, %137 : vector<8x256xf32>
    %139 = arith.addf %128, %133 : vector<8x256xf32>
    %140 = arith.addf %139, %138 : vector<8x256xf32>
    %141 = arith.negf %140 : vector<8x256xf32>
    %142 = math.exp %141 : vector<8x256xf32>
    %cst_107 = arith.constant 1.000000e+00 : f32
    %143 = vector.broadcast %cst_107 : f32 to vector<8x256xf32>
    %144 = arith.addf %143, %142 : vector<8x256xf32>
    %145 = arith.divf %143, %144 : vector<8x256xf32>
    %146 = arith.mulf %140, %145 : vector<8x256xf32>
    %147 = arith.addf %146, %1 : vector<8x256xf32>
    %c0_108 = arith.constant 0 : index
    %c0_109 = arith.constant 0 : index
    %c0_110 = arith.constant 0 : index
    %148 = vector.load %arg4[%c0_108, %c0_109, %c0_110] : memref<1x8x256xf32, #tpu.memory_space<vmem>>, vector<1x8x256xf32>
    %149 = vector.shape_cast %148 : vector<1x8x256xf32> to vector<8x256xf32>
    %150 = vector.shape_cast %147 : vector<8x256xf32> to vector<1x8x256xf32>
    tpu.vector_store %arg4[%c0_108, %c0_109, %c0_110], %150 {strides = array<i32>} : memref<1x8x256xf32, #tpu.memory_space<vmem>>, vector<1x8x256xf32>,
    return
  }
  func.func @transform_0(%arg0: i32) -> (i32, i32, i32) {
    %c0_i32 = arith.constant 0 : i32
    %c0_i32_0 = arith.constant 0 : i32
    %c0_i32_1 = arith.constant 0 : i32
    return %arg0, %c0_i32, %c0_i32_0 : i32, i32, i32
  }
  func.func @transform_1(%arg0: i32) -> (i32, i32, i32, i32) {
    %c0_i32 = arith.constant 0 : i32
    %c0_i32_0 = arith.constant 0 : i32
    %c0_i32_1 = arith.constant 0 : i32
    %c0_i32_2 = arith.constant 0 : i32
    %c0_i32_3 = arith.constant 0 : i32
    return %c0_i32, %c0_i32_0, %c0_i32_1, %c0_i32_2 : i32, i32, i32, i32
  }
  func.func @transform_2(%arg0: i32) -> (i32, i32, i32, i32) {
    %c0_i32 = arith.constant 0 : i32
    %c0_i32_0 = arith.constant 0 : i32
    %c0_i32_1 = arith.constant 0 : i32
    %c0_i32_2 = arith.constant 0 : i32
    %c0_i32_3 = arith.constant 0 : i32
    return %c0_i32, %c0_i32_0, %c0_i32_1, %c0_i32_2 : i32, i32, i32, i32
  }
  func.func @transform_3(%arg0: i32) -> (i32, i32, i32) {
    %c0_i32 = arith.constant 0 : i32
    %c0_i32_0 = arith.constant 0 : i32
    %c0_i32_1 = arith.constant 0 : i32
    return %arg0, %c0_i32, %c0_i32_0 : i32, i32, i32
  }
}

</mosaic_0001>

<llo_original>
// kernel: tpu_custom_call.1
$region0: #{tpu_custom_call.1}
  #allocation0 [shape = 'u32[]', space=smem, size = 0x4, offset = 0x4, fixed_abs, tag = 'smem constant byte address 0x4 - core index']
  #allocation1 [shape = 'u32[72,128]{1,0:T(1,128)}', space=vmem, size = 0x9000, scoped, tag = 'internal scratch']
  %s0 = inlined_call_operand.hbm [shape: f32[1,8,256], index: 0, kind: input, shape index: {}]
  %s1 = inlined_call_operand.hbm [shape: f32[2,4,2,256], index: 1, kind: input, shape index: {}]
  %s2 = inlined_call_operand.hbm [shape: f32[2,9,8,256], index: 2, kind: input, shape index: {}]
  %s3 = inlined_call_operand.hbm [shape: f32[1,8,256], index: 3, kind: output, shape index: {}]
  %s4 = sld [smem:[#allocation0]]
  $region34: #{tpu_custom_call.1} parent=0
    _
  %s6 = ssub.s32 1, %s4
  %s7 = scalar_select 0, %s6, %s4
  $region1: #{tpu_custom_call.1} parent=0
    #allocation2 [shape = 'u8[8192]{0}', space=vmem, size = 0x2000, scoped, tag = 'input window, operand 0, single buffered']
    #allocation3 [shape = 's32[1]{0}', space=sflag, size = 0x4, scoped, tag = 'scoped memory for tpu_custom_call.1']
    #allocation4 [shape = 's32[1]{0}', space=sflag, size = 0x4, scoped, tag = 'scoped memory for tpu_custom_call.1']
    #allocation5 [shape = 'u8[16384]{0}', space=vmem, size = 0x4000, scoped, tag = 'input window, operand 1, single buffered']
    #allocation6 [shape = 's32[1]{0}', space=sflag, size = 0x4, scoped, tag = 'scoped memory for tpu_custom_call.1']
    #allocation7 [shape = 'u8[147456]{0}', space=vmem, size = 0x24000, scoped, tag = 'input window, operand 2, single buffered']
    #allocation8 [shape = 'u8[8192]{0}', space=vmem, size = 0x2000, scoped, tag = 'output window, operand 0, single buffered']
    %8 = vsyncpa [#allocation3], 0
    %9 = vsyncpa [#allocation6], 0
    %10 = vsyncpa [#allocation4], 0
    // Predicated region
    $region2: #{tpu_custom_call.1} parent=1 // pred_check
      _
    $region3: #{tpu_custom_call.1} parent=1 // pred_check_branch
      %12 = sbr.rel (0) target = $region5
    $region4: #{tpu_custom_call.1} parent=1 // pred_region
      %14 = vsyncadd [#allocation3], 0
      %s16 = sshll.u32 %s0, 4
      %s17 = int_to_ptr.hbm [resolvable:$true] %s16
      %s18 = sshll.u32 [#allocation2], 4
      %s19 = int_to_ptr.vmem [resolvable:$true] %s18
      %21 = dma.hbm_to_vmem [thread:$0]  %s17, 256, %s19, [#allocation3]
    $region5: #{tpu_custom_call.1} parent=1 // pred_fallthru
      _
    // Predicated region
    $region6: #{tpu_custom_call.1} parent=1 // pred_check
      _
    $region7: #{tpu_custom_call.1} parent=1 // pred_check_branch
      %23 = sbr.rel (0) target = $region9
    $region8: #{tpu_custom_call.1} parent=1 // pred_region
      %25 = vsyncadd [#allocation6], 0
      %s26 = sshll.u32 %s1, 4
      %s27 = int_to_ptr.hbm [resolvable:$true] %s26
      %s28 = sshll.u32 [#allocation5], 4
      %s29 = int_to_ptr.vmem [resolvable:$true] %s28
      %34 = dma.hbm_to_vmem [thread:$0]  %s27, 512, %s29, [#allocation6], 64, 64, 4
    $region9: #{tpu_custom_call.1} parent=1 // pred_fallthru
      _
    // Predicated region
    $region10: #{tpu_custom_call.1} parent=1 // pred_check
      _
    $region11: #{tpu_custom_call.1} parent=1 // pred_check_branch
      %36 = sbr.rel (0) target = $region13
    $region12: #{tpu_custom_call.1} parent=1 // pred_region
      %38 = vsyncadd [#allocation6], 0
      %s39 = sshll.u32 %s2, 4
      %s40 = int_to_ptr.hbm [resolvable:$true] %s39
      %s41 = sshll.u32 [#allocation7], 4
      %s42 = int_to_ptr.vmem [resolvable:$true] %s41
      %47 = dma.hbm_to_vmem [thread:$0]  %s40, 4608, %s42, [#allocation6], 256, 256, 16
    $region13: #{tpu_custom_call.1} parent=1 // pred_fallthru
      _
    // Predicated region
    $region14: #{tpu_custom_call.1} parent=1 // pred_check
      _
    $region15: #{tpu_custom_call.1} parent=1 // pred_check_branch
      %49 = sbr.rel (0) target = $region17
    $region16: #{tpu_custom_call.1} parent=1 // pred_region
      %51 = dma.done [#allocation3], 256
    $region17: #{tpu_custom_call.1} parent=1 // pred_fallthru
      _
    // Predicated region
    $region18: #{tpu_custom_call.1} parent=1 // pred_check
      _
    $region19: #{tpu_custom_call.1} parent=1 // pred_check_branch
      %53 = sbr.rel (0) target = $region21
    $region20: #{tpu_custom_call.1} parent=1 // pred_region
      %55 = dma.done [#allocation6], 512
    $region21: #{tpu_custom_call.1} parent=1 // pred_fallthru
      _
    // Predicated region
    $region22: #{tpu_custom_call.1} parent=1 // pred_check
      _
    $region23: #{tpu_custom_call.1} parent=1 // pred_check_branch
      %57 = sbr.rel (0) target = $region25
    $region24: #{tpu_custom_call.1} parent=1 // pred_region
      %59 = dma.done [#allocation6], 4608
    $region25: #{tpu_custom_call.1} parent=1 // pred_fallthru
      _
    %v60 = vld [vmem:[#allocation2] sm:$0xff]
    %v61 = vld [vmem:[#allocation2 + $0x8] sm:$0xff]
    %v62 = vld [vmem:[#allocation5] sm:$0xf]
    %v65 = vrot.slane %v61, 6
    %vm66 = vcmask 1041408
    %v67 = vsel %vm66, %v60, %v65
    %v69 = vmul.f32 %v62, %v67
    %s70 = scalar_lea.vmem [#allocation5], 4
    %v71 = vld [vmem:[%s70] sm:$0xf]
    %72 = vst.sshfl [vmem:[#allocation1] sm:$0xff pattern:$0x73625140] %v60
    %73 = vst.sshfl [vmem:[#allocation1 + $0x8] sm:$0xff pattern:$0x73625140] %v61
    %s74 = scalar_lea.vmem [#allocation1], 1
    %v75 = vld [vmem:[%s74] ss:$4 sm:$0xff]
    %v77 = vmul.f32 %v71, %v75
    %s78 = scalar_lea.vmem [#allocation5], 8
    %v79 = vld [vmem:[%s78] sm:$0xf]
    %80 = vst.sshfl [vmem:[#allocation1] sm:$0xff pattern:$0x73625140] %v60
    %81 = vst.sshfl [vmem:[#allocation1 + $0x8] sm:$0xff pattern:$0x73625140] %v61
    %s82 = scalar_lea.vmem [#allocation1], 2
    %v83 = vld [vmem:[%s82] ss:$4 sm:$0xff]
    %v85 = vmul.f32 %v79, %v83
    %s86 = scalar_lea.vmem [#allocation5], 12
    %v87 = vld [vmem:[%s86] sm:$0xf]
    %88 = vst.sshfl [vmem:[#allocation1] sm:$0xff pattern:$0x73625140] %v60
    %89 = vst.sshfl [vmem:[#allocation1 + $0x8] sm:$0xff pattern:$0x73625140] %v61
    %s90 = scalar_lea.vmem [#allocation1], 3
    %v91 = vld [vmem:[%s90] ss:$4 sm:$0xff]
    %v93 = vmul.f32 %v87, %v91
    %v94 = vadd.f32 %v69, %v77
    %v95 = vadd.f32 %v85, %v93
    %v96 = vadd.f32 %v94, %v95
    %v97 = vxor.u32 %v96, 2147483648
    %v98 = vmul.f32 %v97, 1.442695
    %v99 = vpow.pop %v98
    %v100 = vadd.f32 %v99, 1.0
    %v101 = vrcp.pop %v100
    %v102 = vmul.f32 %v100, %v101
    %v103 = vsub.f32 1.0, %v102
    %v104 = vmul.f32 %v101, %v103
    %v105 = vadd.f32 %v101, %v104
    %vm106 = vweird.f32 %v100
    %vm107 = vweird.f32 %v101
    %vm108 = vmor %vm106, %vm107
    %v109 = vsel %vm108, %v101, %v105
    %v110 = vand.u32 2147483647, %v100
    %vm111 = vcmp.eq.f32.partialorder %v110, 8.507059e+37
    %v112 = vand.u32 %v100, 2147483648
    %v113 = vor.u32 1.1754944e-38, %v112
    %v114 = vsel %vm111, %v113, %v109
    %v115 = vmul.f32 1.0, %v114
    %v116 = vmul.f32 %v96, %v115
    %118 = vst [vmem:[#allocation1] ss:$4 sm:$0xff] %v116
    %v119 = vld.sshfl [vmem:[#allocation1] sm:$0xff pattern:$0x73625140]
    %v120 = vld.sshfl [vmem:[#allocation1 + $0x8] sm:$0xff pattern:$0x73625140]
    %s123 = scalar_lea.vmem [#allocation1], 1
    %124 = vst [vmem:[%s123] ss:$4 sm:$0xff] %v116
    %v125 = vld.sshfl [vmem:[#allocation1] sm:$0xff pattern:$0x73625140]
    %v126 = vld.sshfl [vmem:[#allocation1 + $0x8] sm:$0xff pattern:$0x73625140]
    %s129 = scalar_lea.vmem [#allocation1], 2
    %130 = vst [vmem:[%s129] ss:$4 sm:$0xff] %v116
    %v131 = vld.sshfl [vmem:[#allocation1] sm:$0xff pattern:$0x73625140]
    %v132 = vld.sshfl [vmem:[#allocation1 + $0x8] sm:$0xff pattern:$0x73625140]
    %s135 = scalar_lea.vmem [#allocation1], 3
    %136 = vst [vmem:[%s135] ss:$4 sm:$0xff] %v116
    %v137 = vld.sshfl [vmem:[#allocation1] sm:$0xff pattern:$0x73625140]
    %v138 = vld.sshfl [vmem:[#allocation1 + $0x8] sm:$0xff pattern:$0x73625140]
    %v141 = vsel %vm66, %v119, %v125
    %v142 = vsel %vm66, %v120, %v126
    %vm143 = vcmask 1043456
    %v144 = vsel %vm143, %v141, %v131
    %v145 = vsel %vm143, %v142, %v132
    %vm146 = vcmask 1045504
    %v147 = vsel %vm146, %v144, %v137
    %v148 = vsel %vm146, %v145, %v138
    %s149 = scalar_lea.vmem [#allocation5], 16
    %v150 = vld [vmem:[%s149] sm:$0xf]
    %v151 = vmul.f32 %v150, %v67
    %s152 = scalar_lea.vmem [#allocation5], 20
    %v153 = vld [vmem:[%s152] sm:$0xf]
    %154 = vst.sshfl [vmem:[#allocation1] sm:$0xff pattern:$0x73625140] %v60
    %155 = vst.sshfl [vmem:[#allocation1 + $0x8] sm:$0xff pattern:$0x73625140] %v61
    %s156 = scalar_lea.vmem [#allocation1], 1
    %v157 = vld [vmem:[%s156] ss:$4 sm:$0xff]
    %v159 = vmul.f32 %v153, %v157
    %s160 = scalar_lea.vmem [#allocation5], 24
    %v161 = vld [vmem:[%s160] sm:$0xf]
    %162 = vst.sshfl [vmem:[#allocation1] sm:$0xff pattern:$0x73625140] %v60
    %163 = vst.sshfl [vmem:[#allocation1 + $0x8] sm:$0xff pattern:$0x73625140] %v61
    %s164 = scalar_lea.vmem [#allocation1], 2
    %v165 = vld [vmem:[%s164] ss:$4 sm:$0xff]
    %v167 = vmul.f32 %v161, %v165
    %s168 = scalar_lea.vmem [#allocation5], 28
    %v169 = vld [vmem:[%s168] sm:$0xf]
    %170 = vst.sshfl [vmem:[#allocation1] sm:$0xff pattern:$0x73625140] %v60
    %171 = vst.sshfl [vmem:[#allocation1 + $0x8] sm:$0xff pattern:$0x73625140] %v61
    %s172 = scalar_lea.vmem [#allocation1], 3
    %v173 = vld [vmem:[%s172] ss:$4 sm:$0xff]
    %v175 = vmul.f32 %v169, %v173
    %v176 = vadd.f32 %v151, %v159
    %v177 = vadd.f32 %v167, %v175
    %v178 = vadd.f32 %v176, %v177
    %v179 = vxor.u32 %v178, 2147483648
    %v180 = vmul.f32 %v179, 1.442695
    %v181 = vpow.pop %v180
    %v182 = vadd.f32 %v181, 1.0
    %v183 = vrcp.pop %v182
    %v184 = vmul.f32 %v182, %v183
    %v185 = vsub.f32 1.0, %v184
    %v186 = vmul.f32 %v183, %v185
    %v187 = vadd.f32 %v183, %v186
    %vm188 = vweird.f32 %v182
    %vm189 = vweird.f32 %v183
    %vm190 = vmor %vm188, %vm189
    %v191 = vsel %vm190, %v183, %v187
    %v192 = vand.u32 2147483647, %v182
    %vm193 = vcmp.eq.f32.partialorder %v192, 8.507059e+37
    %v194 = vand.u32 %v182, 2147483648
    %v195 = vor.u32 1.1754944e-38, %v194
    %v196 = vsel %vm193, %v195, %v191
    %v197 = vmul.f32 1.0, %v196
    %v198 = vmul.f32 %v178, %v197
    %200 = vst [vmem:[#allocation1] ss:$4 sm:$0xff] %v198
    %v201 = vld.sshfl [vmem:[#allocation1] sm:$0xff pattern:$0x73625140]
    %v202 = vld.sshfl [vmem:[#allocation1 + $0x8] sm:$0xff pattern:$0x73625140]
    %s205 = scalar_lea.vmem [#allocation1], 1
    %206 = vst [vmem:[%s205] ss:$4 sm:$0xff] %v198
    %v207 = vld.sshfl [vmem:[#allocation1] sm:$0xff pattern:$0x73625140]
    %v208 = vld.sshfl [vmem:[#allocation1 + $0x8] sm:$0xff pattern:$0x73625140]
    %s211 = scalar_lea.vmem [#allocation1], 2
    %212 = vst [vmem:[%s211] ss:$4 sm:$0xff] %v198
    %v213 = vld.sshfl [vmem:[#allocation1] sm:$0xff pattern:$0x73625140]
    %v214 = vld.sshfl [vmem:[#allocation1 + $0x8] sm:$0xff pattern:$0x73625140]
    %s217 = scalar_lea.vmem [#allocation1], 3
    %218 = vst [vmem:[%s217] ss:$4 sm:$0xff] %v198
    %v219 = vld.sshfl [vmem:[#allocation1] sm:$0xff pattern:$0x73625140]
    %v220 = vld.sshfl [vmem:[#allocation1 + $0x8] sm:$0xff pattern:$0x73625140]
    %v223 = vsel %vm66, %v201, %v207
    %v224 = vsel %vm66, %v202, %v208
    %v225 = vsel %vm143, %v223, %v213
    %v226 = vsel %vm143, %v224, %v214
    %v227 = vsel %vm146, %v225, %v219
    %v228 = vsel %vm146, %v226, %v220
    %229 = vrot.lane.b32.xlu0 %v147, 17
    %v230 = vpop.permute.xlu0 %229
    %231 = vrot.lane.b32.xlu0 %v148, 17
    %v232 = vpop.permute.xlu0 %231
    %v233 = vlaneseq
    %v234 = vand.u32 %v233, 127
    %vm235 = vcmp.lt.s32.totalorder %v234, 17
    %v236 = vsel %vm235, %v230, %v232
    %v237 = vsel %vm235, %v232, %v230
    %v238 = vld [vmem:[#allocation7] sm:$0xff]
    %v239 = vld [vmem:[#allocation7 + $0x8] sm:$0xff]
    %v240 = vmul.f32 %v238, %v237
    %v241 = vmul.f32 %v239, %v236
    %242 = vrot.lane.b32.xlu0 %v147, 16
    %v243 = vpop.permute.xlu0 %242
    %244 = vrot.lane.b32.xlu0 %v148, 16
    %v245 = vpop.permute.xlu0 %244
    %vm246 = vcmp.lt.s32.totalorder %v234, 16
    %v247 = vsel %vm246, %v243, %v245
    %v248 = vsel %vm246, %v245, %v243
    %s249 = scalar_lea.vmem [#allocation7], 16
    %v250 = vld [vmem:[%s249] sm:$0xff]
    %v251 = vld [vmem:[%s249 + $0x8] sm:$0xff]
    %v252 = vmul.f32 %v250, %v248
    %v253 = vmul.f32 %v251, %v247
    %254 = vrot.lane.b32.xlu0 %v147, 15
    %v255 = vpop.permute.xlu0 %254
    %256 = vrot.lane.b32.xlu0 %v148, 15
    %v257 = vpop.permute.xlu0 %256
    %vm258 = vcmp.lt.s32.totalorder %v234, 15
    %v259 = vsel %vm258, %v255, %v257
    %v260 = vsel %vm258, %v257, %v255
    %s261 = scalar_lea.vmem [#allocation7], 32
    %v262 = vld [vmem:[%s261] sm:$0xff]
    %v263 = vld [vmem:[%s261 + $0x8] sm:$0xff]
    %v264 = vmul.f32 %v262, %v260
    %v265 = vmul.f32 %v263, %v259
    %266 = vrot.lane.b32.xlu0 %v147, 1
    %v267 = vpop.permute.xlu0 %266
    %268 = vrot.lane.b32.xlu0 %v148, 1
    %v269 = vpop.permute.xlu0 %268
    %vm270 = vcmp.lt.s32.totalorder %v234, 1
    %v271 = vsel %vm270, %v267, %v269
    %v272 = vsel %vm270, %v269, %v267
    %s273 = scalar_lea.vmem [#allocation7], 48
    %v274 = vld [vmem:[%s273] sm:$0xff]
    %v275 = vld [vmem:[%s273 + $0x8] sm:$0xff]
    %v276 = vmul.f32 %v274, %v272
    %v277 = vmul.f32 %v275, %v271
    %v278 = vadd.f32 %v240, %v276
    %v279 = vadd.f32 %v241, %v277
    %s280 = scalar_lea.vmem [#allocation7], 64
    %v281 = vld [vmem:[%s280] sm:$0xff]
    %v282 = vld [vmem:[%s280 + $0x8] sm:$0xff]
    %v283 = vmul.f32 %v281, %v147
    %v284 = vmul.f32 %v282, %v148
    %v285 = vadd.f32 %v252, %v283
    %v286 = vadd.f32 %v253, %v284
    %287 = vrot.lane.b32.xlu0 %v147, 127
    %v288 = vpop.permute.xlu0 %287
    %289 = vrot.lane.b32.xlu0 %v148, 127
    %v290 = vpop.permute.xlu0 %289
    %vm291 = vcmp.lt.s32.totalorder %v234, 127
    %v292 = vsel %vm291, %v288, %v290
    %v293 = vsel %vm291, %v290, %v288
    %s294 = scalar_lea.vmem [#allocation7], 80
    %v295 = vld [vmem:[%s294] sm:$0xff]
    %v296 = vld [vmem:[%s294 + $0x8] sm:$0xff]
    %v297 = vmul.f32 %v295, %v292
    %v298 = vmul.f32 %v296, %v293
    %v299 = vadd.f32 %v264, %v297
    %v300 = vadd.f32 %v265, %v298
    %301 = vrot.lane.b32.xlu0 %v147, 113
    %v302 = vpop.permute.xlu0 %301
    %303 = vrot.lane.b32.xlu0 %v148, 113
    %v304 = vpop.permute.xlu0 %303
    %vm305 = vcmp.lt.s32.totalorder %v234, 113
    %v306 = vsel %vm305, %v302, %v304
    %v307 = vsel %vm305, %v304, %v302
    %s308 = scalar_lea.vmem [#allocation7], 96
    %v309 = vld [vmem:[%s308] sm:$0xff]
    %v310 = vld [vmem:[%s308 + $0x8] sm:$0xff]
    %v311 = vmul.f32 %v309, %v306
    %v312 = vmul.f32 %v310, %v307
    %v313 = vadd.f32 %v278, %v311
    %v314 = vadd.f32 %v279, %v312
    %315 = vrot.lane.b32.xlu0 %v147, 112
    %v316 = vpop.permute.xlu0 %315
    %317 = vrot.lane.b32.xlu0 %v148, 112
    %v318 = vpop.permute.xlu0 %317
    %vm319 = vcmp.lt.s32.totalorder %v234, 112
    %v320 = vsel %vm319, %v316, %v318
    %v321 = vsel %vm319, %v318, %v316
    %s322 = scalar_lea.vmem [#allocation7], 112
    %v323 = vld [vmem:[%s322] sm:$0xff]
    %v324 = vld [vmem:[%s322 + $0x8] sm:$0xff]
    %v325 = vmul.f32 %v323, %v320
    %v326 = vmul.f32 %v324, %v321
    %v327 = vadd.f32 %v285, %v325
    %v328 = vadd.f32 %v286, %v326
    %329 = vrot.lane.b32.xlu0 %v147, 111
    %v330 = vpop.permute.xlu0 %329
    %331 = vrot.lane.b32.xlu0 %v148, 111
    %v332 = vpop.permute.xlu0 %331
    %vm333 = vcmp.lt.s32.totalorder %v234, 111
    %v334 = vsel %vm333, %v330, %v332
    %v335 = vsel %vm333, %v332, %v330
    %s336 = scalar_lea.vmem [#allocation7], 128
    %v337 = vld [vmem:[%s336] sm:$0xff]
    %v338 = vld [vmem:[%s336 + $0x8] sm:$0xff]
    %v339 = vmul.f32 %v337, %v334
    %v340 = vmul.f32 %v338, %v335
    %v341 = vadd.f32 %v299, %v339
    %v342 = vadd.f32 %v300, %v340
    %343 = vrot.lane.b32.xlu0 %v227, 17
    %v344 = vpop.permute.xlu0 %343
    %345 = vrot.lane.b32.xlu0 %v228, 17
    %v346 = vpop.permute.xlu0 %345
    %v347 = vsel %vm235, %v344, %v346
    %v348 = vsel %vm235, %v346, %v344
    %s349 = scalar_lea.vmem [#allocation7], 144
    %v350 = vld [vmem:[%s349] sm:$0xff]
    %v351 = vld [vmem:[%s349 + $0x8] sm:$0xff]
    %v352 = vmul.f32 %v350, %v348
    %v353 = vmul.f32 %v351, %v347
    %v354 = vadd.f32 %v313, %v352
    %v355 = vadd.f32 %v314, %v353
    %356 = vrot.lane.b32.xlu0 %v227, 16
    %v357 = vpop.permute.xlu0 %356
    %358 = vrot.lane.b32.xlu0 %v228, 16
    %v359 = vpop.permute.xlu0 %358
    %v360 = vsel %vm246, %v357, %v359
    %v361 = vsel %vm246, %v359, %v357
    %s362 = scalar_lea.vmem [#allocation7], 160
    %v363 = vld [vmem:[%s362] sm:$0xff]
    %v364 = vld [vmem:[%s362 + $0x8] sm:$0xff]
    %v365 = vmul.f32 %v363, %v361
    %v366 = vmul.f32 %v364, %v360
    %v367 = vadd.f32 %v327, %v365
    %v368 = vadd.f32 %v328, %v366
    %369 = vrot.lane.b32.xlu0 %v227, 15
    %v370 = vpop.permute.xlu0 %369
    %371 = vrot.lane.b32.xlu0 %v228, 15
    %v372 = vpop.permute.xlu0 %371
    %v373 = vsel %vm258, %v370, %v372
    %v374 = vsel %vm258, %v372, %v370
    %s375 = scalar_lea.vmem [#allocation7], 176
    %v376 = vld [vmem:[%s375] sm:$0xff]
    %v377 = vld [vmem:[%s375 + $0x8] sm:$0xff]
    %v378 = vmul.f32 %v376, %v374
    %v379 = vmul.f32 %v377, %v373
    %v380 = vadd.f32 %v341, %v378
    %v381 = vadd.f32 %v342, %v379
    %382 = vrot.lane.b32.xlu0 %v227, 1
    %v383 = vpop.permute.xlu0 %382
    %384 = vrot.lane.b32.xlu0 %v228, 1
    %v385 = vpop.permute.xlu0 %384
    %v386 = vsel %vm270, %v383, %v385
    %v387 = vsel %vm270, %v385, %v383
    %s388 = scalar_lea.vmem [#allocation7], 192
    %v389 = vld [vmem:[%s388] sm:$0xff]
    %v390 = vld [vmem:[%s388 + $0x8] sm:$0xff]
    %v391 = vmul.f32 %v389, %v387
    %v392 = vmul.f32 %v390, %v386
    %v393 = vadd.f32 %v354, %v391
    %v394 = vadd.f32 %v355, %v392
    %s395 = scalar_lea.vmem [#allocation7], 208
    %v396 = vld [vmem:[%s395] sm:$0xff]
    %v397 = vld [vmem:[%s395 + $0x8] sm:$0xff]
    %v398 = vmul.f32 %v396, %v227
    %v399 = vmul.f32 %v397, %v228
    %v400 = vadd.f32 %v367, %v398
    %v401 = vadd.f32 %v368, %v399
    %402 = vrot.lane.b32.xlu0 %v227, 127
    %v403 = vpop.permute.xlu0 %402
    %404 = vrot.lane.b32.xlu0 %v228, 127
    %v405 = vpop.permute.xlu0 %404
    %v406 = vsel %vm291, %v403, %v405
    %v407 = vsel %vm291, %v405, %v403
    %s408 = scalar_lea.vmem [#allocation7], 224
    %v409 = vld [vmem:[%s408] sm:$0xff]
    %v410 = vld [vmem:[%s408 + $0x8] sm:$0xff]
    %v411 = vmul.f32 %v409, %v406
    %v412 = vmul.f32 %v410, %v407
    %v413 = vadd.f32 %v380, %v411
    %v414 = vadd.f32 %v381, %v412
    %415 = vrot.lane.b32.xlu0 %v227, 113
    %v416 = vpop.permute.xlu0 %415
    %417 = vrot.lane.b32.xlu0 %v228, 113
    %v418 = vpop.permute.xlu0 %417
    %v419 = vsel %vm305, %v416, %v418
    %v420 = vsel %vm305, %v418, %v416
    %s421 = scalar_lea.vmem [#allocation7], 240
    %v422 = vld [vmem:[%s421] sm:$0xff]
    %v423 = vld [vmem:[%s421 + $0x8] sm:$0xff]
    %v424 = vmul.f32 %v422, %v419
    %v425 = vmul.f32 %v423, %v420
    %v426 = vadd.f32 %v393, %v424
    %v427 = vadd.f32 %v394, %v425
    %428 = vrot.lane.b32.xlu0 %v227, 112
    %v429 = vpop.permute.xlu0 %428
    %430 = vrot.lane.b32.xlu0 %v228, 112
    %v431 = vpop.permute.xlu0 %430
    %v432 = vsel %vm319, %v429, %v431
    %v433 = vsel %vm319, %v431, %v429
    %s434 = scalar_lea.vmem [#allocation7], 256
    %v435 = vld [vmem:[%s434] sm:$0xff]
    %v436 = vld [vmem:[%s434 + $0x8] sm:$0xff]
    %v437 = vmul.f32 %v435, %v432
    %v438 = vmul.f32 %v436, %v433
    %v439 = vadd.f32 %v400, %v437
    %v440 = vadd.f32 %v401, %v438
    %441 = vrot.lane.b32.xlu0 %v227, 111
    %v442 = vpop.permute.xlu0 %441
    %443 = vrot.lane.b32.xlu0 %v228, 111
    %v444 = vpop.permute.xlu0 %443
    %v445 = vsel %vm333, %v442, %v444
    %v446 = vsel %vm333, %v444, %v442
    %s447 = scalar_lea.vmem [#allocation7], 272
    %v448 = vld [vmem:[%s447] sm:$0xff]
    %v449 = vld [vmem:[%s447 + $0x8] sm:$0xff]
    %v450 = vmul.f32 %v448, %v445
    %v451 = vmul.f32 %v449, %v446
    %v452 = vadd.f32 %v413, %v450
    %v453 = vadd.f32 %v414, %v451
    %v454 = vadd.f32 %v426, %v439
    %v455 = vadd.f32 %v427, %v440
    %v456 = vadd.f32 %v454, %v452
    %v457 = vadd.f32 %v455, %v453
    %v458 = vxor.u32 %v456, 2147483648
    %v459 = vxor.u32 %v457, 2147483648
    %v460 = vmul.f32 %v458, 1.442695
    %v461 = vpow.pop %v460
    %v462 = vmul.f32 %v459, 1.442695
    %v463 = vpow.pop %v462
    %v464 = vadd.f32 %v461, 1.0
    %v465 = vadd.f32 %v463, 1.0
    %v466 = vrcp.pop %v464
    %v467 = vmul.f32 %v464, %v466
    %v468 = vsub.f32 1.0, %v467
    %v469 = vmul.f32 %v466, %v468
    %v470 = vadd.f32 %v466, %v469
    %vm471 = vweird.f32 %v464
    %vm472 = vweird.f32 %v466
    %vm473 = vmor %vm471, %vm472
    %v474 = vsel %vm473, %v466, %v470
    %v475 = vand.u32 2147483647, %v464
    %vm476 = vcmp.eq.f32.partialorder %v475, 8.507059e+37
    %v477 = vand.u32 %v464, 2147483648
    %v478 = vor.u32 1.1754944e-38, %v477
    %v479 = vsel %vm476, %v478, %v474
    %v480 = vmul.f32 1.0, %v479
    %v481 = vrcp.pop %v465
    %v482 = vmul.f32 %v465, %v481
    %v483 = vsub.f32 1.0, %v482
    %v484 = vmul.f32 %v481, %v483
    %v485 = vadd.f32 %v481, %v484
    %vm486 = vweird.f32 %v465
    %vm487 = vweird.f32 %v481
    %vm488 = vmor %vm486, %vm487
    %v489 = vsel %vm488, %v481, %v485
    %v490 = vand.u32 2147483647, %v465
    %vm491 = vcmp.eq.f32.partialorder %v490, 8.507059e+37
    %v492 = vand.u32 %v465, 2147483648
    %v493 = vor.u32 1.1754944e-38, %v492
    %v494 = vsel %vm491, %v493, %v489
    %v495 = vmul.f32 1.0, %v494
    %v496 = vmul.f32 %v456, %v480
    %v497 = vmul.f32 %v457, %v495
    %v498 = vadd.f32 %v496, %v60
    %v499 = vadd.f32 %v497, %v61
    %500 = vst [vmem:[#allocation8] sm:$0xff] %v498
    %501 = vst [vmem:[#allocation8 + $0x8] sm:$0xff] %v499
    // Predicated region
    $region26: #{tpu_custom_call.1} parent=1 // pred_check
      _
    $region27: #{tpu_custom_call.1} parent=1 // pred_check_branch
      %503 = sbr.rel (0) target = $region29
    $region28: #{tpu_custom_call.1} parent=1 // pred_region
      %505 = vsyncadd [#allocation4], 0
      %s507 = sshll.u32 [#allocation8], 4
      %s508 = int_to_ptr.vmem [resolvable:$true] %s507
      %s509 = sshll.u32 %s3, 4
      %s510 = int_to_ptr.hbm [resolvable:$true] %s509
      %512 = dma.vmem_to_hbm [thread:$0]  %s508, 256, %s510, [#allocation4]
    $region29: #{tpu_custom_call.1} parent=1 // pred_fallthru
      _
    // Predicated region
    $region30: #{tpu_custom_call.1} parent=1 // pred_check
      _
    $region31: #{tpu_custom_call.1} parent=1 // pred_check_branch
      %514 = sbr.rel (0) target = $region33
    $region32: #{tpu_custom_call.1} parent=1 // pred_region
      %516 = dma.done [#allocation4], 256
    $region33: #{tpu_custom_call.1} parent=1 // pred_fallthru
      _
    %517 = vsyncpa [#allocation3], 1
    %518 = vsyncpa [#allocation6], 1
    %519 = vsyncpa [#allocation4], 1

</llo_original>
